<compile_context>
chip_gen: v7x
topology: tpu7x:2x2x1
jax: 0.10.0
libtpu: 0.0.40
codegen_flags: <defaults>
</compile_context>

<pallas_src>
import functools

import jax
import jax.numpy as jnp
from jax.experimental import pallas as pl
from jax.experimental.pallas import tpu as pltpu


def _round_up(x, m):
    return ((x + m - 1) // m) * m


def value_net_kernel(x_ref, w1_ref, b1_ref, w2_ref, b2_ref, w3_ref, b3_ref, o_ref):
    # x streamed in its native dtype; cast to bf16 on the VPU (no extra HBM pass in the wrapper).
    x = x_ref[...].astype(jnp.bfloat16)                                   # (Bt, in_dim)

    # fc1 + relu : bf16 x bf16 -> f32 accumulate on the MXU.
    h1 = jnp.dot(x, w1_ref[...], preferred_element_type=jnp.float32)
    h1 = jnp.maximum(h1 + b1_ref[...], 0.0)                               # (Bt, 128) f32

    # fc2 + relu.
    h2 = jnp.dot(h1.astype(jnp.bfloat16), w2_ref[...],
                 preferred_element_type=jnp.float32)
    h2 = jnp.maximum(h2 + b2_ref[...], 0.0)                               # (Bt, 64) f32

    # out (64 -> 1) on the MXU as a trans-B contraction: (8,64) x (Bt,64)^T -> (8, Bt).
    # w3 is row-replicated to 8 sublanes; keep row 0. Result is already a lane-dense row,
    # so the store path is ~Bt/128 vregs instead of ~Bt/8 masked column stores.
    o8 = jax.lax.dot_general(
        w3_ref[...], h2.astype(jnp.bfloat16),
        dimension_numbers=(((1,), (1,)), ((), ())),
        preferred_element_type=jnp.float32)                               # (8, Bt)
    o_ref[...] = o8[0:1, :] + b3_ref[...]                                 # (1, Bt)


def _pick_block_b(B, block_b, in_dim, x_itemsize, vmem_budget=12 * 1024 * 1024):
    # Tile must be a multiple of 128 (output lane-dim blocks) which also satisfies sublane x8.
    block_b = max(128, _round_up(block_b, 128))
    if B >= 2 * block_b:
        bt = block_b
    else:
        # >= 2 balanced tiles whenever B allows it, so v7x's two TensorCores both get work.
        bt = min(block_b, max(128, _round_up(pl.cdiv(B, 2), 128)))

    def footprint(b):
        x_bufs = 2 * b * in_dim * x_itemsize                 # double-buffered x blocks
        o_bufs = 2 * b * 4                                   # double-buffered (1, Bt) f32 out
        temps = b * (2 * in_dim + 6 * 128 + 6 * 64 + 8 * 4)  # bf16 copies + f32 h1/h2/o8
        weights = 2 * (in_dim * 128 + 128 * 64 + 8 * 64) + 4 * (128 + 64 + 1)
        return x_bufs + o_bufs + temps + weights

    # Shrink until the per-step footprint fits the budget (matters for large in_dim on
    # v5e's 16 MiB scoped default and v7x's 64 MiB physical VMEM).
    while bt > 256 and footprint(bt) > vmem_budget:
        bt = max(256, _round_up(bt // 2, 128))
    return bt


def value_net_forward(x, params, *, block_b=1024):
    """x: (B, in_dim), any float dtype. Returns (B,) float32 — matches .squeeze(-1)."""
    w1, b1, w2, b2, w3, b3 = params
    B, in_dim = x.shape

    # Weights/biases are tiny: cast/reshape them in the wrapper (negligible HBM traffic).
    # x is left untouched and streamed directly by the kernel.
    w1b = w1.astype(jnp.bfloat16)
    w2b = w2.astype(jnp.bfloat16)
    w3r = jnp.broadcast_to(w3.reshape(1, -1), (8, w3.shape[0])).astype(jnp.bfloat16)
    b1f = b1.reshape(1, -1).astype(jnp.float32)
    b2f = b2.reshape(1, -1).astype(jnp.float32)
    b3f = b3.reshape(1, 1).astype(jnp.float32)

    bt = _pick_block_b(B, block_b, in_dim, jnp.dtype(x.dtype).itemsize)
    nb = pl.cdiv(B, bt)

    # x BlockSpec: default double buffer; triple-buffer for wide features where the kernel is
    # genuinely HBM-bound (v6e sits nearest the HBM/compute crossover).
    if in_dim >= 512:
        x_spec = pl.BlockSpec((bt, in_dim), lambda i: (i, 0), pipeline_mode=pl.Buffered(3))
    else:
        x_spec = pl.BlockSpec((bt, in_dim), lambda i: (i, 0))

    out_row = pl.pallas_call(
        value_net_kernel,
        out_shape=jax.ShapeDtypeStruct((1, nb * bt), jnp.float32),  # lane-dense row blocks
        grid=(nb,),
        in_specs=[
            x_spec,                                          # x: streamed / pipelined
            pl.BlockSpec(w1b.shape, lambda i: (0, 0)),       # weights & biases: VMEM-resident
            pl.BlockSpec(b1f.shape, lambda i: (0, 0)),
            pl.BlockSpec(w2b.shape, lambda i: (0, 0)),
            pl.BlockSpec(b2f.shape, lambda i: (0, 0)),
            pl.BlockSpec(w3r.shape, lambda i: (0, 0)),
            pl.BlockSpec(b3f.shape, lambda i: (0, 0)),
        ],
        out_specs=pl.BlockSpec((1, bt), lambda i: (0, i)),
        compiler_params=pltpu.CompilerParams(
            dimension_semantics=("parallel",),               # shard batch tiles across v7x TCs
            vmem_limit_bytes=32 * 1024 * 1024,               # explicit, safe on v5e/v6e/v7x
        ),
    )(x, w1b, b1f, w2b, b2f, w3r, b3f)

    # Drop the (possibly ragged) tail: the last x block may read past B (unspecified rows),
    # whose outputs land in columns >= B of the (1, nb*bt) result and are sliced away here.
    return out_row.reshape(-1)[:B]


def init_params(key, in_dim):
    """Deterministic init mimicking nn.Linear default (U[-1/sqrt(fan_in), 1/sqrt(fan_in)]).
    Weights returned already transposed to (in_features, out_features)."""
    dims = [(in_dim, 128), (128, 64), (64, 1)]
    params = []
    for i, (fi, fo) in enumerate(dims):
        kw, kb = jax.random.split(jax.random.fold_in(key, i))
        bound = 1.0 / (fi ** 0.5)
        w = jax.random.uniform(kw, (fi, fo), jnp.float32, -bound, bound)
        b = jax.random.uniform(kb, (1, fo), jnp.float32, -bound, bound)
        params += [w, b]
    return tuple(params)


def reference_forward(x, params):
    w1, b1, w2, b2, w3, b3 = params
    x = x.astype(jnp.float32)
    h1 = jax.nn.relu(x @ w1 + b1)
    h2 = jax.nn.relu(h1 @ w2 + b2)
    return (h2 @ w3 + b3)[:, 0]


if __name__ == "__main__":
    key = jax.random.PRNGKey(0)
    B, in_dim = 512, 32   # small demo shapes; block_b=128 -> 4 pipelined grid steps

    kx, kp = jax.random.split(key)
    x = jax.random.normal(kx, (B, in_dim), jnp.float32)
    params = init_params(kp, in_dim)

    fwd = functools.partial(value_net_forward, block_b=128)
    out = jax.block_until_ready(fwd(x, params))

    ref = reference_forward(x, params)
    assert out.shape == (B,)
    # bf16 activations/weights (f32 accumulation) => loosened tolerance vs the f32 reference.
    err = float(jnp.max(jnp.abs(out - ref)))
    assert jnp.allclose(out, ref, atol=4e-2, rtol=4e-2), err

    print("KERNEL_OK")
</pallas_src>

<mosaic_0001>
module attributes {stable_mosaic.version = 11 : i64} {
  func.func @value_net_kernel(%arg0: i32, %arg1: memref<128x32xf32, #tpu.memory_space<vmem>>, %arg2: memref<32x128xbf16, #tpu.memory_space<vmem>>, %arg3: memref<1x128xf32, #tpu.memory_space<vmem>>, %arg4: memref<128x64xbf16, #tpu.memory_space<vmem>>, %arg5: memref<1x64xf32, #tpu.memory_space<vmem>>, %arg6: memref<8x64xbf16, #tpu.memory_space<vmem>>, %arg7: memref<1x1xf32, #tpu.memory_space<vmem>>, %arg8: memref<1x128xf32, #tpu.memory_space<vmem>>) attributes {dimension_semantics = [#tpu.dimension_semantics<parallel>], iteration_bounds = array<i64: 4>, scalar_prefetch = 0 : i64, scratch_operands = 0 : i64, tpu.core_type = #tpu.core_type<tc>, window_params = [{transform_indices = @transform_0, window_bounds = array<i64: 128, 32>}, {pipeline_mode = #tpu.pipeline_mode<synchronous>, transform_indices = @transform_1, window_bounds = array<i64: 32, 128>}, {pipeline_mode = #tpu.pipeline_mode<synchronous>, transform_indices = @transform_2, window_bounds = array<i64: 1, 128>}, {pipeline_mode = #tpu.pipeline_mode<synchronous>, transform_indices = @transform_3, window_bounds = array<i64: 128, 64>}, {pipeline_mode = #tpu.pipeline_mode<synchronous>, transform_indices = @transform_4, window_bounds = array<i64: 1, 64>}, {pipeline_mode = #tpu.pipeline_mode<synchronous>, transform_indices = @transform_5, window_bounds = array<i64: 8, 64>}, {pipeline_mode = #tpu.pipeline_mode<synchronous>, transform_indices = @transform_6, window_bounds = array<i64: 1, 1>}, {transform_indices = @transform_7, window_bounds = array<i64: 1, 128>}]} {
    %c0 = arith.constant 0 : index
    %c0_0 = arith.constant 0 : index
    %0 = vector.load %arg1[%c0, %c0_0] : memref<128x32xf32, #tpu.memory_space<vmem>>, vector<128x32xf32>
    %1 = arith.truncf %0 : vector<128x32xf32> to vector<128x32xbf16>
    %c0_1 = arith.constant 0 : index
    %c0_2 = arith.constant 0 : index
    %2 = vector.load %arg2[%c0_1, %c0_2] : memref<32x128xbf16, #tpu.memory_space<vmem>>, vector<32x128xbf16>
    %cst = arith.constant dense<0.000000e+00> : vector<128x128xf32>
    %3 = tpu.matmul %1, %2, %cst {dimension_numbers = #tpu.dot_dimension_numbers<[1], [0], [0], [1], [0, 0, 1, 1], [], []>} : vector<128x32xbf16>, vector<32x128xbf16>, vector<128x128xf32> -> vector<128x128xf32>
    %c0_3 = arith.constant 0 : index
    %c0_4 = arith.constant 0 : index
    %4 = vector.load %arg3[%c0_3, %c0_4] : memref<1x128xf32, #tpu.memory_space<vmem>>, vector<1x128xf32>
    %5 = vector.broadcast %4 : vector<1x128xf32> to vector<128x128xf32>
    %6 = arith.addf %3, %5 : vector<128x128xf32>
    %cst_5 = arith.constant 0.000000e+00 : f32
    %7 = vector.broadcast %cst_5 : f32 to vector<128x128xf32>
    %8 = arith.maximumf %6, %7 : vector<128x128xf32>
    %9 = arith.truncf %8 : vector<128x128xf32> to vector<128x128xbf16>
    %c0_6 = arith.constant 0 : index
    %c0_7 = arith.constant 0 : index
    %10 = vector.load %arg4[%c0_6, %c0_7] : memref<128x64xbf16, #tpu.memory_space<vmem>>, vector<128x64xbf16>
    %cst_8 = arith.constant dense<0.000000e+00> : vector<128x64xf32>
    %11 = tpu.matmul %9, %10, %cst_8 {dimension_numbers = #tpu.dot_dimension_numbers<[1], [0], [0], [1], [0, 0, 1, 1], [], []>} : vector<128x128xbf16>, vector<128x64xbf16>, vector<128x64xf32> -> vector<128x64xf32>
    %c0_9 = arith.constant 0 : index
    %c0_10 = arith.constant 0 : index
    %12 = vector.load %arg5[%c0_9, %c0_10] : memref<1x64xf32, #tpu.memory_space<vmem>>, vector<1x64xf32>
    %13 = vector.broadcast %12 : vector<1x64xf32> to vector<128x64xf32>
    %14 = arith.addf %11, %13 : vector<128x64xf32>
    %cst_11 = arith.constant 0.000000e+00 : f32
    %15 = vector.broadcast %cst_11 : f32 to vector<128x64xf32>
    %16 = arith.maximumf %14, %15 : vector<128x64xf32>
    %c0_12 = arith.constant 0 : index
    %c0_13 = arith.constant 0 : index
    %17 = vector.load %arg6[%c0_12, %c0_13] : memref<8x64xbf16, #tpu.memory_space<vmem>>, vector<8x64xbf16>
    %18 = arith.truncf %16 : vector<128x64xf32> to vector<128x64xbf16>
    %cst_14 = arith.constant dense<0.000000e+00> : vector<8x128xf32>
    %19 = tpu.matmul %17, %18, %cst_14 {dimension_numbers = #tpu.dot_dimension_numbers<[1], [1], [0], [0], [0, 0, 1, 0], [], []>} : vector<8x64xbf16>, vector<128x64xbf16>, vector<8x128xf32> -> vector<8x128xf32>
    %20 = vector.extract_strided_slice %19 {offsets = [0, 0], sizes = [1, 128], strides = [1, 1]} : vector<8x128xf32> to vector<1x128xf32>
    %c0_15 = arith.constant 0 : index
    %c0_16 = arith.constant 0 : index
    %21 = vector.load %arg7[%c0_15, %c0_16] : memref<1x1xf32, #tpu.memory_space<vmem>>, vector<1x1xf32>
    %22 = vector.broadcast %21 : vector<1x1xf32> to vector<1x128xf32>
    %23 = arith.addf %20, %22 : vector<1x128xf32>
    %c0_17 = arith.constant 0 : index
    %c0_18 = arith.constant 0 : index
    %24 = vector.load %arg8[%c0_17, %c0_18] : memref<1x128xf32, #tpu.memory_space<vmem>>, vector<1x128xf32>
    tpu.vector_store %arg8[%c0_17, %c0_18], %23 {strides = array<i32>} : memref<1x128xf32, #tpu.memory_space<vmem>>, vector<1x128xf32>,
    return
  }
  func.func @transform_0(%arg0: i32) -> (i32, i32) {
    %c0_i32 = arith.constant 0 : i32
    %c0_i32_0 = arith.constant 0 : i32
    return %arg0, %c0_i32 : i32, i32
  }
  func.func @transform_1(%arg0: i32) -> (i32, i32) {
    %c0_i32 = arith.constant 0 : i32
    %c0_i32_0 = arith.constant 0 : i32
    %c0_i32_1 = arith.constant 0 : i32
    return %c0_i32, %c0_i32_0 : i32, i32
  }
  func.func @transform_2(%arg0: i32) -> (i32, i32) {
    %c0_i32 = arith.constant 0 : i32
    %c0_i32_0 = arith.constant 0 : i32
    %c0_i32_1 = arith.constant 0 : i32
    return %c0_i32, %c0_i32_0 : i32, i32
  }
  func.func @transform_3(%arg0: i32) -> (i32, i32) {
    %c0_i32 = arith.constant 0 : i32
    %c0_i32_0 = arith.constant 0 : i32
    %c0_i32_1 = arith.constant 0 : i32
    return %c0_i32, %c0_i32_0 : i32, i32
  }
  func.func @transform_4(%arg0: i32) -> (i32, i32) {
    %c0_i32 = arith.constant 0 : i32
    %c0_i32_0 = arith.constant 0 : i32
    %c0_i32_1 = arith.constant 0 : i32
    return %c0_i32, %c0_i32_0 : i32, i32
  }
  func.func @transform_5(%arg0: i32) -> (i32, i32) {
    %c0_i32 = arith.constant 0 : i32
    %c0_i32_0 = arith.constant 0 : i32
    %c0_i32_1 = arith.constant 0 : i32
    return %c0_i32, %c0_i32_0 : i32, i32
  }
  func.func @transform_6(%arg0: i32) -> (i32, i32) {
    %c0_i32 = arith.constant 0 : i32
    %c0_i32_0 = arith.constant 0 : i32
    %c0_i32_1 = arith.constant 0 : i32
    return %c0_i32, %c0_i32_0 : i32, i32
  }
  func.func @transform_7(%arg0: i32) -> (i32, i32) {
    %c0_i32 = arith.constant 0 : i32
    %c0_i32_0 = arith.constant 0 : i32
    return %c0_i32, %arg0 : i32, i32
  }
}

</mosaic_0001>

<llo_original>
// kernel: tpu_custom_call.1
$region0: #{tpu_custom_call.1}
  #allocation0 [shape = 'u32[]', space=smem, size = 0x4, offset = 0x4, fixed_abs, tag = 'smem constant byte address 0x4 - core index']
  #allocation1 [shape = 'u32[144,128]{1,0:T(1,128)}', space=vmem, size = 0x12000, scoped, tag = 'internal scratch']
  #allocation2 [shape = 'f32[1,1]{1,0:T(1,128)S(1)}', space=vmem, size = 0x200, scoped, tag = 'scoped memory for tpu_custom_call.1']
  %s0 = inlined_call_operand.vmem [shape: f32[512,32], index: 0, kind: input, shape index: {}]
  %s1 = inlined_call_operand.vmem [shape: bf16[32,128], index: 1, kind: input, shape index: {}]
  %s2 = inlined_call_operand.vmem [shape: f32[1,128], index: 2, kind: input, shape index: {}]
  %s3 = inlined_call_operand.vmem [shape: bf16[128,64], index: 3, kind: input, shape index: {}]
  %s4 = inlined_call_operand.vmem [shape: f32[1,64], index: 4, kind: input, shape index: {}]
  %s5 = inlined_call_operand.vmem [shape: bf16[8,64], index: 5, kind: input, shape index: {}]
  %s6 = inlined_call_operand.<no memory space> [shape: f32[1,1], index: 6, kind: input, shape index: {}]
  %s7 = inlined_call_operand.hbm [shape: f32[1,512], index: 7, kind: output, shape index: {}]
  %s8 = sld [smem:[#allocation0]]
  $region61: #{tpu_custom_call.1} parent=0
    _
  %s10 = ssub.s32 1, %s8
  %s11 = scalar_select 0, %s10, %s8
  %v12 = vstv %s6
  %13 = vst [vmem:[#allocation2] sm:$0x1] %v12
  $region1: #{tpu_custom_call.1} parent=0
    #allocation3 [shape = 'u8[1024]{0}', space=vmem, size = 0x400, scoped, tag = 'output window, operand 0']
    #allocation4 [shape = 's32[2]{0}', space=sflag, size = 0x8, scoped, tag = 'scoped memory for tpu_custom_call.1']
    %14 = vsyncpa [#allocation4], 0
    %s15 = scalar_lea.sflag [#allocation4], 1
    %16 = vsyncpa %s15, 0
    loop: start=0, step=1, limit=6
    $region2: #{tpu_custom_call.1} parent=1 // loop_pre_header
      _
    $region3: #{tpu_custom_call.1} parent=1 // loop_header
      %s18 = sphi 0, %s22
      %p19 = scmp.ge.s32.totalorder %s18, 6
      %s28 = sphi 0, %s30
      %s31 = sphi 0, %s28
      %s32 = sphi 0, %s31
      %s48 = sphi 0, %s32
      %s52 = sphi 0, %s52
      %s54 = sphi 0, %s52
      %s55 = sphi 0, %s54
      %s69 = sphi 0, %s55
      %s73 = sphi 0, %s73
      %s75 = sphi 0, %s73
      %s76 = sphi 0, %s75
      %s90 = sphi 0, %s76
      %s94 = sphi 0, %s94
      %s96 = sphi 0, %s94
      %s97 = sphi 0, %s96
      %s111 = sphi 0, %s97
      %s115 = sphi 0, %s115
      %s117 = sphi 0, %s115
      %s118 = sphi 0, %s117
      %s132 = sphi 0, %s118
      %s136 = sphi 0, %s136
      %s138 = sphi 0, %s136
      %s139 = sphi 0, %s138
      %s153 = sphi 0, %s139
      %s157 = sphi 0, %s157
      %s159 = sphi 0, %s157
      %s160 = sphi 0, %s159
      %s174 = sphi 0, %s160
      %s180 = sphi 0, %s182
      %s183 = sphi 0, %s180
      %s184 = sphi 0, %s183
      %s200 = sphi 0, %s184
    $region4: #{tpu_custom_call.1} parent=1 // loop_header_branch
      %21 = sbr.rel (%p19) target = $region8
    $region5: #{tpu_custom_call.1} parent=1 // loop_body
      %s23 = ssub.s32 %s18, 1
      %s24 = ssub.s32 %s18, 2
      %s25 = sadd.s32 %s18, 1
      %s26 = ssub.s32 %s18, %s25
      %p27 = scmp.eq.s32.totalorder %s26, 0
      %s29 = sadd.s32 %s28, 1
      %s30 = scalar_select %p27, %s28, %s29
      %p33 = pneg %p27
      %p34 = scmp.eq.s32.totalorder %s18, 3
      %p35 = por %p33, %p34
      %p36 = scmp.ne.s32.totalorder %s28, %s31
      %p37 = scmp.eq.s32.totalorder %s18, 0
      %p38 = por %p36, %p37
      %p39 = scmp.ne.s32.totalorder %s28, %s31
      %p40 = scmp.eq.s32.totalorder %s23, 3
      %p41 = por %p39, %p40
      %p42 = scmp.ne.s32.totalorder %s31, %s32
      %p43 = scmp.eq.s32.totalorder %s23, 0
      %p44 = por %p42, %p43
      %p45 = scmp.ne.s32.totalorder %s31, %s32
      %p46 = scmp.eq.s32.totalorder %s24, 3
      %p47 = por %p45, %p46
      %p49 = scmp.ne.s32.totalorder %s32, %s48
      %p50 = scmp.eq.s32.totalorder %s24, 0
      %p51 = por %p49, %p50
      %s53 = sadd.s32 %s52, 1
      %p56 = scmp.eq.s32.totalorder %s18, 3
      %p57 = scmp.ne.s32.totalorder %s52, %s54
      %p58 = scmp.eq.s32.totalorder %s18, 0
      %p59 = por %p57, %p58
      %p60 = scmp.ne.s32.totalorder %s52, %s54
      %p61 = scmp.eq.s32.totalorder %s23, 3
      %p62 = por %p60, %p61
      %p63 = scmp.ne.s32.totalorder %s54, %s55
      %p64 = scmp.eq.s32.totalorder %s23, 0
      %p65 = por %p63, %p64
      %p66 = scmp.ne.s32.totalorder %s54, %s55
      %p67 = scmp.eq.s32.totalorder %s24, 3
      %p68 = por %p66, %p67
      %p70 = scmp.ne.s32.totalorder %s55, %s69
      %p71 = scmp.eq.s32.totalorder %s24, 0
      %p72 = por %p70, %p71
      %s74 = sadd.s32 %s73, 1
      %p77 = scmp.eq.s32.totalorder %s18, 3
      %p78 = scmp.ne.s32.totalorder %s73, %s75
      %p79 = scmp.eq.s32.totalorder %s18, 0
      %p80 = por %p78, %p79
      %p81 = scmp.ne.s32.totalorder %s73, %s75
      %p82 = scmp.eq.s32.totalorder %s23, 3
      %p83 = por %p81, %p82
      %p84 = scmp.ne.s32.totalorder %s75, %s76
      %p85 = scmp.eq.s32.totalorder %s23, 0
      %p86 = por %p84, %p85
      %p87 = scmp.ne.s32.totalorder %s75, %s76
      %p88 = scmp.eq.s32.totalorder %s24, 3
      %p89 = por %p87, %p88
      %p91 = scmp.ne.s32.totalorder %s76, %s90
      %p92 = scmp.eq.s32.totalorder %s24, 0
      %p93 = por %p91, %p92
      %s95 = sadd.s32 %s94, 1
      %p98 = scmp.eq.s32.totalorder %s18, 3
      %p99 = scmp.ne.s32.totalorder %s94, %s96
      %p100 = scmp.eq.s32.totalorder %s18, 0
      %p101 = por %p99, %p100
      %p102 = scmp.ne.s32.totalorder %s94, %s96
      %p103 = scmp.eq.s32.totalorder %s23, 3
      %p104 = por %p102, %p103
      %p105 = scmp.ne.s32.totalorder %s96, %s97
      %p106 = scmp.eq.s32.totalorder %s23, 0
      %p107 = por %p105, %p106
      %p108 = scmp.ne.s32.totalorder %s96, %s97
      %p109 = scmp.eq.s32.totalorder %s24, 3
      %p110 = por %p108, %p109
      %p112 = scmp.ne.s32.totalorder %s97, %s111
      %p113 = scmp.eq.s32.totalorder %s24, 0
      %p114 = por %p112, %p113
      %s116 = sadd.s32 %s115, 1
      %p119 = scmp.eq.s32.totalorder %s18, 3
      %p120 = scmp.ne.s32.totalorder %s115, %s117
      %p121 = scmp.eq.s32.totalorder %s18, 0
      %p122 = por %p120, %p121
      %p123 = scmp.ne.s32.totalorder %s115, %s117
      %p124 = scmp.eq.s32.totalorder %s23, 3
      %p125 = por %p123, %p124
      %p126 = scmp.ne.s32.totalorder %s117, %s118
      %p127 = scmp.eq.s32.totalorder %s23, 0
      %p128 = por %p126, %p127
      %p129 = scmp.ne.s32.totalorder %s117, %s118
      %p130 = scmp.eq.s32.totalorder %s24, 3
      %p131 = por %p129, %p130
      %p133 = scmp.ne.s32.totalorder %s118, %s132
      %p134 = scmp.eq.s32.totalorder %s24, 0
      %p135 = por %p133, %p134
      %s137 = sadd.s32 %s136, 1
      %p140 = scmp.eq.s32.totalorder %s18, 3
      %p141 = scmp.ne.s32.totalorder %s136, %s138
      %p142 = scmp.eq.s32.totalorder %s18, 0
      %p143 = por %p141, %p142
      %p144 = scmp.ne.s32.totalorder %s136, %s138
      %p145 = scmp.eq.s32.totalorder %s23, 3
      %p146 = por %p144, %p145
      %p147 = scmp.ne.s32.totalorder %s138, %s139
      %p148 = scmp.eq.s32.totalorder %s23, 0
      %p149 = por %p147, %p148
      %p150 = scmp.ne.s32.totalorder %s138, %s139
      %p151 = scmp.eq.s32.totalorder %s24, 3
      %p152 = por %p150, %p151
      %p154 = scmp.ne.s32.totalorder %s139, %s153
      %p155 = scmp.eq.s32.totalorder %s24, 0
      %p156 = por %p154, %p155
      %s158 = sadd.s32 %s157, 1
      %p161 = scmp.eq.s32.totalorder %s18, 3
      %p162 = scmp.ne.s32.totalorder %s157, %s159
      %p163 = scmp.eq.s32.totalorder %s18, 0
      %p164 = por %p162, %p163
      %p165 = scmp.ne.s32.totalorder %s157, %s159
      %p166 = scmp.eq.s32.totalorder %s23, 3
      %p167 = por %p165, %p166
      %p168 = scmp.ne.s32.totalorder %s159, %s160
      %p169 = scmp.eq.s32.totalorder %s23, 0
      %p170 = por %p168, %p169
      %p171 = scmp.ne.s32.totalorder %s159, %s160
      %p172 = scmp.eq.s32.totalorder %s24, 3
      %p173 = por %p171, %p172
      %p175 = scmp.ne.s32.totalorder %s160, %s174
      %p176 = scmp.eq.s32.totalorder %s24, 0
      %p177 = por %p175, %p176
      %s178 = ssub.s32 %s18, %s25
      %p179 = scmp.eq.s32.totalorder %s178, 0
      %s181 = sadd.s32 %s180, 1
      %s182 = scalar_select %p179, %s180, %s181
      %p185 = pneg %p179
      %p186 = scmp.eq.s32.totalorder %s18, 3
      %p187 = por %p185, %p186
      %p188 = scmp.ne.s32.totalorder %s180, %s183
      %p189 = scmp.eq.s32.totalorder %s18, 0
      %p190 = por %p188, %p189
      %p191 = scmp.ne.s32.totalorder %s180, %s183
      %p192 = scmp.eq.s32.totalorder %s23, 3
      %p193 = por %p191, %p192
      %p194 = scmp.ne.s32.totalorder %s183, %s184
      %p195 = scmp.eq.s32.totalorder %s23, 0
      %p196 = por %p194, %p195
      %p197 = scmp.ne.s32.totalorder %s183, %s184
      %p198 = scmp.eq.s32.totalorder %s24, 3
      %p199 = por %p197, %p198
      %p201 = scmp.ne.s32.totalorder %s184, %s200
      %p202 = scmp.eq.s32.totalorder %s24, 0
      %p203 = por %p201, %p202
      %p204 = scmp.le.s32.totalorder 1, %s18
      %p205 = scmp.lt.s32.totalorder %s18, 5
      %p206 = pnand %p204, %p205
      %p207 = pneg %p206
      // Predicated region
      $region9: #{tpu_custom_call.1} parent=5 // pred_check
        _
      $region10: #{tpu_custom_call.1} parent=5 // pred_check_branch
        %209 = sbr.rel (%p206) target = $region12
      $region11: #{tpu_custom_call.1} parent=5 // pred_region
        %s210 = ssub.s32 %s18, 1
        // Predicated region
        $region13: #{tpu_custom_call.1} parent=11 // pred_check
          %p211 = pneg %p65
        $region14: #{tpu_custom_call.1} parent=11 // pred_check_branch
          %213 = sbr.rel (%p211) target = $region16
        $region15: #{tpu_custom_call.1} parent=11 // pred_region
          _
        $region16: #{tpu_custom_call.1} parent=11 // pred_fallthru
          _
        // Predicated region
        $region17: #{tpu_custom_call.1} parent=11 // pred_check
          %p214 = pneg %p86
        $region18: #{tpu_custom_call.1} parent=11 // pred_check_branch
          %216 = sbr.rel (%p214) target = $region20
        $region19: #{tpu_custom_call.1} parent=11 // pred_region
          _
        $region20: #{tpu_custom_call.1} parent=11 // pred_fallthru
          _
        // Predicated region
        $region21: #{tpu_custom_call.1} parent=11 // pred_check
          %p217 = pneg %p107
        $region22: #{tpu_custom_call.1} parent=11 // pred_check_branch
          %219 = sbr.rel (%p217) target = $region24
        $region23: #{tpu_custom_call.1} parent=11 // pred_region
          _
        $region24: #{tpu_custom_call.1} parent=11 // pred_fallthru
          _
        // Predicated region
        $region25: #{tpu_custom_call.1} parent=11 // pred_check
          %p220 = pneg %p128
        $region26: #{tpu_custom_call.1} parent=11 // pred_check_branch
          %222 = sbr.rel (%p220) target = $region28
        $region27: #{tpu_custom_call.1} parent=11 // pred_region
          _
        $region28: #{tpu_custom_call.1} parent=11 // pred_fallthru
          _
        // Predicated region
        $region29: #{tpu_custom_call.1} parent=11 // pred_check
          %p223 = pneg %p149
        $region30: #{tpu_custom_call.1} parent=11 // pred_check_branch
          %225 = sbr.rel (%p223) target = $region32
        $region31: #{tpu_custom_call.1} parent=11 // pred_region
          _
        $region32: #{tpu_custom_call.1} parent=11 // pred_fallthru
          _
        // Predicated region
        $region33: #{tpu_custom_call.1} parent=11 // pred_check
          %p226 = pneg %p170
        $region34: #{tpu_custom_call.1} parent=11 // pred_check_branch
          %228 = sbr.rel (%p226) target = $region36
        $region35: #{tpu_custom_call.1} parent=11 // pred_region
          _
        $region36: #{tpu_custom_call.1} parent=11 // pred_fallthru
          _
      $region12: #{tpu_custom_call.1} parent=5 // pred_fallthru
        _
      %p229 = scmp.lt.s32.totalorder %s18, 4
      // Predicated region
      $region37: #{tpu_custom_call.1} parent=5 // pred_check
        %p230 = pneg %p229
      $region38: #{tpu_custom_call.1} parent=5 // pred_check_branch
        %232 = sbr.rel (%p230) target = $region40
      $region39: #{tpu_custom_call.1} parent=5 // pred_region
        // Predicated region
        $region41: #{tpu_custom_call.1} parent=39 // pred_check
          %p233 = pneg %p38
        $region42: #{tpu_custom_call.1} parent=39 // pred_check_branch
          %235 = sbr.rel (%p233) target = $region44
        $region43: #{tpu_custom_call.1} parent=39 // pred_region
          %s236 = smul.u32 16, %s18
          %p237 = scmp.lt.s32.totalorder %s236, 63
          %s238 = scalar_select %p237, %s236, 63
          %s239 = smul.addr %s238, 8
          %s240 = scalar_lea.vmem %s0, %s239
          %s241 = smul.u32 16, %s18
        $region44: #{tpu_custom_call.1} parent=39 // pred_fallthru
          _
      $region40: #{tpu_custom_call.1} parent=5 // pred_fallthru
        _
      %p242 = scmp.le.s32.totalorder 1, %s18
      %p243 = scmp.lt.s32.totalorder %s18, 5
      %p244 = pnand %p242, %p243
      %p245 = pneg %p244
      // Predicated region
      $region45: #{tpu_custom_call.1} parent=5 // pred_check
        _
      $region46: #{tpu_custom_call.1} parent=5 // pred_check_branch
        %247 = sbr.rel (%p244) target = $region48
      $region47: #{tpu_custom_call.1} parent=5 // pred_region
        %s248 = ssub.s32 %s18, 1
        %s249 = smul.u32 16, %s23
        %p250 = scmp.lt.s32.totalorder %s249, 63
        %s251 = scalar_select %p250, %s249, 63
        %s252 = smul.addr %s251, 8
        %s253 = scalar_lea.vmem %s0, %s252
        %p254 = pneg %p44
        %p255 = pneg %p41
        %p256 = pneg %p65
        %p257 = pneg %p62
        %p258 = pneg %p86
        %p259 = pneg %p83
        %p260 = pneg %p107
        %p261 = pneg %p104
        %p262 = pneg %p128
        %p263 = pneg %p125
        %p264 = pneg %p149
        %p265 = pneg %p146
        %p266 = pneg %p170
        %p267 = pneg %p167
        %p268 = pneg %p196
        %p269 = pneg %p193
        %s270 = sand.u32 %s183, 1
        %s271 = scalar_lea.sflag [#allocation4], %s270
        %s272 = sand.u32 %s183, 1
        %s273 = scalar_lea.vmem [#allocation3], %s272
        %s274 = smul.u32 16, %s23
        %p275 = scmp.lt.s32.totalorder %s274, 63
        %s276 = scalar_select %p275, %s274, 63
        %s277 = smul.addr %s276, 8
        %s278 = scalar_lea.vmem %s0, %s277
        %s279 = smul.u32 16, %s23
        %v281 = vld [vmem:[%s278] sm:$0xff]
        %v282 = vld [vmem:[%s278 + $0x8] sm:$0xff]
        %v283 = vld [vmem:[%s278 + $0x10] sm:$0xff]
        %v284 = vld [vmem:[%s278 + $0x18] sm:$0xff]
        %v285 = vld [vmem:[%s278 + $0x20] sm:$0xff]
        %v286 = vld [vmem:[%s278 + $0x28] sm:$0xff]
        %v287 = vld [vmem:[%s278 + $0x30] sm:$0xff]
        %v288 = vld [vmem:[%s278 + $0x38] sm:$0xff]
        %v289 = vld [vmem:[%s278 + $0x40] sm:$0xff]
        %v290 = vld [vmem:[%s278 + $0x48] sm:$0xff]
        %v291 = vld [vmem:[%s278 + $0x50] sm:$0xff]
        %v292 = vld [vmem:[%s278 + $0x58] sm:$0xff]
        %v293 = vld [vmem:[%s278 + $0x60] sm:$0xff]
        %v294 = vld [vmem:[%s278 + $0x68] sm:$0xff]
        %v295 = vld [vmem:[%s278 + $0x70] sm:$0xff]
        %v296 = vld [vmem:[%s278 + $0x78] sm:$0xff]
        %v297 = vpack.c.bf16 %v282, %v281
        %v298 = vpack.c.bf16 %v284, %v283
        %v299 = vpack.c.bf16 %v286, %v285
        %v300 = vpack.c.bf16 %v288, %v287
        %v301 = vpack.c.bf16 %v290, %v289
        %v302 = vpack.c.bf16 %v292, %v291
        %v303 = vpack.c.bf16 %v294, %v293
        %v304 = vpack.c.bf16 %v296, %v295
        %v305 = vld [vmem:[%s1] sm:$0xf]
        %v306 = vld [vmem:[%s1 + $0x4] sm:$0xf]
        %v307 = vld [vmem:[%s1 + $0x8] sm:$0xf]
        %v308 = vld [vmem:[%s1 + $0xc] sm:$0xf]
        %v309 = vld [vmem:[%s2] sm:$0x1]
        %v311 = vlaneseq
        %v312 = vshrl.u32 %v311, 7
        %v313 = vsub.s32 0, %v312
        %v314 = vrot.slane %v309, %v313
        %v320 = vunpack.c.l.b16 %v305
        %v321 = vunpack.c.l.b16 %v306
        %v322 = vunpack.c.l.b16 %v307
        %v323 = vunpack.c.l.b16 %v308
        %v324 = vpack.c.b16 %v321, %v320
        %v325 = vpack.c.b16 %v323, %v322
        %vm328 = vcmask 261120
        %v330 = vsel %vm328, %v297, 0
        %v333 = vsel %vm328, %v298, 0
        %v336 = vsel %vm328, %v299, 0
        %v339 = vsel %vm328, %v300, 0
        %v342 = vsel %vm328, %v301, 0
        %v345 = vsel %vm328, %v302, 0
        %v348 = vsel %vm328, %v303, 0
        %v351 = vsel %vm328, %v304, 0
        %353 = vmatprep.subr.bf16.mxu0 0
        %354 = vmatpush1.bf16.msra.mxu0 %v324
        %355 = vmatprep.subr.bf16.mxu0 0
        %356 = vmatpush1.bf16.msra.mxu0 %v325
        %357 = vmatprep.subr.bf16.mxu0 0
        %358 = vmatpush1.bf16.msra.mxu0 0
        %359 = vmatprep.subr.bf16.mxu0 0
        %360 = vmatpush1.bf16.msra.mxu0 0
        %361 = vmatprep.subr.bf16.mxu0 0
        %362 = vmatpush1.bf16.msra.mxu0 0
        %363 = vmatprep.subr.bf16.mxu0 0
        %364 = vmatpush1.bf16.msra.mxu0 0
        %365 = vmatprep.subr.bf16.mxu0 0
        %366 = vmatpush1.bf16.msra.mxu0 0
        %367 = vmatprep.subr.bf16.mxu0 0
        %368 = vmatpush1.bf16.msra.mxu0 0
        %369 = vmatprep.subr.bf16.mxu0 0
        %370 = vmatpush1.bf16.msra.mxu0 0
        %371 = vmatprep.subr.bf16.mxu0 0
        %372 = vmatpush1.bf16.msra.mxu0 0
        %373 = vmatprep.subr.bf16.mxu0 0
        %374 = vmatpush1.bf16.msra.mxu0 0
        %375 = vmatprep.subr.bf16.mxu0 0
        %376 = vmatpush1.bf16.msra.mxu0 0
        %377 = vmatprep.subr.bf16.mxu0 0
        %378 = vmatpush1.bf16.msra.mxu0 0
        %379 = vmatprep.subr.bf16.mxu0 0
        %380 = vmatpush1.bf16.msra.mxu0 0
        %381 = vmatprep.subr.bf16.mxu0 0
        %382 = vmatpush1.bf16.msra.mxu0 0
        %383 = vmatprep.subr.bf16.mxu0 0
        %384 = vmatpush1.bf16.msra.mxu0 0
        %385 = vmatprep.mubr.bf16.mxu0 0
        %386 = vmatmul.mubr.bf16.gmra.mrb[0].mxu0 %v330
        %v387 = vpop.f32.mrb[0].mxu0
        %v388 = vadd.f32 %v314, %v387
        %v389 = vpop.f32.mrb[0].mxu0
        %v390 = vpop.f32.mrb[0].mxu0
        %v391 = vadd.f32 %v314, %v390
        %v392 = vpop.f32.mrb[0].mxu0
        %393 = vmatprep.mubr.bf16.mxu0 0
        %394 = vmatmul.mubr.bf16.gmra.mrb[0].mxu0 %v333
        %v395 = vpop.f32.mrb[0].mxu0
        %v396 = vadd.f32 %v314, %v395
        %v397 = vpop.f32.mrb[0].mxu0
        %v398 = vpop.f32.mrb[0].mxu0
        %v399 = vadd.f32 %v314, %v398
        %v400 = vpop.f32.mrb[0].mxu0
        %401 = vmatprep.mubr.bf16.mxu0 0
        %402 = vmatmul.mubr.bf16.gmra.mrb[0].mxu0 %v336
        %v403 = vpop.f32.mrb[0].mxu0
        %v404 = vadd.f32 %v314, %v403
        %v405 = vpop.f32.mrb[0].mxu0
        %v406 = vpop.f32.mrb[0].mxu0
        %v407 = vadd.f32 %v314, %v406
        %v408 = vpop.f32.mrb[0].mxu0
        %409 = vmatprep.mubr.bf16.mxu0 0
        %410 = vmatmul.mubr.bf16.gmra.mrb[0].mxu0 %v339
        %v411 = vpop.f32.mrb[0].mxu0
        %v412 = vadd.f32 %v314, %v411
        %v413 = vpop.f32.mrb[0].mxu0
        %v414 = vpop.f32.mrb[0].mxu0
        %v415 = vadd.f32 %v314, %v414
        %v416 = vpop.f32.mrb[0].mxu0
        %417 = vmatprep.mubr.bf16.mxu0 0
        %418 = vmatmul.mubr.bf16.gmra.mrb[0].mxu0 %v342
        %v419 = vpop.f32.mrb[0].mxu0
        %v420 = vadd.f32 %v314, %v419
        %v421 = vpop.f32.mrb[0].mxu0
        %v422 = vpop.f32.mrb[0].mxu0
        %v423 = vadd.f32 %v314, %v422
        %v424 = vpop.f32.mrb[0].mxu0
        %425 = vmatprep.mubr.bf16.mxu0 0
        %426 = vmatmul.mubr.bf16.gmra.mrb[0].mxu0 %v345
        %v427 = vpop.f32.mrb[0].mxu0
        %v428 = vadd.f32 %v314, %v427
        %v429 = vpop.f32.mrb[0].mxu0
        %v430 = vpop.f32.mrb[0].mxu0
        %v431 = vadd.f32 %v314, %v430
        %v432 = vpop.f32.mrb[0].mxu0
        %433 = vmatprep.mubr.bf16.mxu0 0
        %434 = vmatmul.mubr.bf16.gmra.mrb[0].mxu0 %v348
        %v435 = vpop.f32.mrb[0].mxu0
        %v436 = vadd.f32 %v314, %v435
        %v437 = vpop.f32.mrb[0].mxu0
        %v438 = vpop.f32.mrb[0].mxu0
        %v439 = vadd.f32 %v314, %v438
        %v440 = vpop.f32.mrb[0].mxu0
        %441 = vmatprep.mubr.bf16.mxu0 0
        %442 = vmatmul.mubr.bf16.gmra.mrb[0].mxu0 %v351
        %v443 = vpop.f32.mrb[0].mxu0
        %v444 = vadd.f32 %v314, %v443
        %v445 = vpop.f32.mrb[0].mxu0
        %v446 = vpop.f32.mrb[0].mxu0
        %v447 = vadd.f32 %v314, %v446
        %v448 = vpop.f32.mrb[0].mxu0
        %449 = vdwg.mxu0
        %v450 = vmax.f32 %v388, 0.0
        %v451 = vmax.f32 %v391, 0.0
        %v452 = vmax.f32 %v396, 0.0
        %v453 = vmax.f32 %v399, 0.0
        %v454 = vmax.f32 %v404, 0.0
        %v455 = vmax.f32 %v407, 0.0
        %v456 = vmax.f32 %v412, 0.0
        %v457 = vmax.f32 %v415, 0.0
        %v458 = vmax.f32 %v420, 0.0
        %v459 = vmax.f32 %v423, 0.0
        %v460 = vmax.f32 %v428, 0.0
        %v461 = vmax.f32 %v431, 0.0
        %v462 = vmax.f32 %v436, 0.0
        %v463 = vmax.f32 %v439, 0.0
        %v464 = vmax.f32 %v444, 0.0
        %v465 = vmax.f32 %v447, 0.0
        %v466 = vpack.c.bf16 %v451, %v450
        %v467 = vpack.c.bf16 %v453, %v452
        %v468 = vpack.c.bf16 %v455, %v454
        %v469 = vpack.c.bf16 %v457, %v456
        %v470 = vpack.c.bf16 %v459, %v458
        %v471 = vpack.c.bf16 %v461, %v460
        %v472 = vpack.c.bf16 %v463, %v462
        %v473 = vpack.c.bf16 %v465, %v464
        %v474 = vld [vmem:[%s3] sm:$0xf]
        %v475 = vld [vmem:[%s3 + $0x4] sm:$0xf]
        %v476 = vld [vmem:[%s3 + $0x8] sm:$0xf]
        %v477 = vld [vmem:[%s3 + $0xc] sm:$0xf]
        %v478 = vld [vmem:[%s3 + $0x10] sm:$0xf]
        %v479 = vld [vmem:[%s3 + $0x14] sm:$0xf]
        %v480 = vld [vmem:[%s3 + $0x18] sm:$0xf]
        %v481 = vld [vmem:[%s3 + $0x1c] sm:$0xf]
        %v482 = vld [vmem:[%s3 + $0x20] sm:$0xf]
        %v483 = vld [vmem:[%s3 + $0x24] sm:$0xf]
        %v484 = vld [vmem:[%s3 + $0x28] sm:$0xf]
        %v485 = vld [vmem:[%s3 + $0x2c] sm:$0xf]
        %v486 = vld [vmem:[%s3 + $0x30] sm:$0xf]
        %v487 = vld [vmem:[%s3 + $0x34] sm:$0xf]
        %v488 = vld [vmem:[%s3 + $0x38] sm:$0xf]
        %v489 = vld [vmem:[%s3 + $0x3c] sm:$0xf]
        %v490 = vld [vmem:[%s4] sm:$0x1]
        %v492 = vlaneseq
        %v493 = vshrl.u32 %v492, 7
        %v494 = vsub.s32 0, %v493
        %v495 = vrot.slane %v490, %v494
        %v513 = vunpack.c.l.b16 %v474
        %v514 = vunpack.c.l.b16 %v475
        %v515 = vunpack.c.l.b16 %v476
        %v516 = vunpack.c.l.b16 %v477
        %v517 = vunpack.c.l.b16 %v478
        %v518 = vunpack.c.l.b16 %v479
        %v519 = vunpack.c.l.b16 %v480
        %v520 = vunpack.c.l.b16 %v481
        %v521 = vunpack.c.l.b16 %v482
        %v522 = vunpack.c.l.b16 %v483
        %v523 = vunpack.c.l.b16 %v484
        %v524 = vunpack.c.l.b16 %v485
        %v525 = vunpack.c.l.b16 %v486
        %v526 = vunpack.c.l.b16 %v487
        %v527 = vunpack.c.l.b16 %v488
        %v528 = vunpack.c.l.b16 %v489
        %v529 = vpack.c.b16 %v514, %v513
        %v530 = vpack.c.b16 %v516, %v515
        %v531 = vpack.c.b16 %v518, %v517
        %v532 = vpack.c.b16 %v520, %v519
        %v533 = vpack.c.b16 %v522, %v521
        %v534 = vpack.c.b16 %v524, %v523
        %v535 = vpack.c.b16 %v526, %v525
        %v536 = vpack.c.b16 %v528, %v527
        %545 = vmatprep.subr.bf16.mxu0 0
        %546 = vmatpush1.bf16.msra.mxu0 %v529
        %547 = vmatprep.subr.bf16.mxu0 0
        %548 = vmatpush1.bf16.msra.mxu0 %v530
        %549 = vmatprep.subr.bf16.mxu0 0
        %550 = vmatpush1.bf16.msra.mxu0 %v531
        %551 = vmatprep.subr.bf16.mxu0 0
        %552 = vmatpush1.bf16.msra.mxu0 %v532
        %553 = vmatprep.subr.bf16.mxu0 0
        %554 = vmatpush1.bf16.msra.mxu0 %v533
        %555 = vmatprep.subr.bf16.mxu0 0
        %556 = vmatpush1.bf16.msra.mxu0 %v534
        %557 = vmatprep.subr.bf16.mxu0 0
        %558 = vmatpush1.bf16.msra.mxu0 %v535
        %559 = vmatprep.subr.bf16.mxu0 0
        %560 = vmatpush1.bf16.msra.mxu0 %v536
        %561 = vmatprep.subr.bf16.mxu0 0
        %562 = vmatpush1.bf16.msra.mxu0 0
        %563 = vmatprep.subr.bf16.mxu0 0
        %564 = vmatpush1.bf16.msra.mxu0 0
        %565 = vmatprep.subr.bf16.mxu0 0
        %566 = vmatpush1.bf16.msra.mxu0 0
        %567 = vmatprep.subr.bf16.mxu0 0
        %568 = vmatpush1.bf16.msra.mxu0 0
        %569 = vmatprep.subr.bf16.mxu0 0
        %570 = vmatpush1.bf16.msra.mxu0 0
        %571 = vmatprep.subr.bf16.mxu0 0
        %572 = vmatpush1.bf16.msra.mxu0 0
        %573 = vmatprep.subr.bf16.mxu0 0
        %574 = vmatpush1.bf16.msra.mxu0 0
        %575 = vmatprep.subr.bf16.mxu0 0
        %576 = vmatpush1.bf16.msra.mxu0 0
        %577 = vmatprep.mubr.bf16.mxu0 0
        %578 = vmatmul.mubr.bf16.gmra.mrb[0].mxu0 %v466
        %v579 = vpop.f32.mrb[0].mxu0
        %v580 = vadd.f32 %v495, %v579
        %v581 = vpop.f32.mrb[0].mxu0
        %v582 = vpop.f32.mrb[0].mxu0
        %v583 = vadd.f32 %v495, %v582
        %v584 = vpop.f32.mrb[0].mxu0
        %585 = vmatprep.mubr.bf16.mxu0 0
        %586 = vmatmul.mubr.bf16.gmra.mrb[0].mxu0 %v467
        %v587 = vpop.f32.mrb[0].mxu0
        %v588 = vadd.f32 %v495, %v587
        %v589 = vpop.f32.mrb[0].mxu0
        %v590 = vpop.f32.mrb[0].mxu0
        %v591 = vadd.f32 %v495, %v590
        %v592 = vpop.f32.mrb[0].mxu0
        %593 = vmatprep.mubr.bf16.mxu0 0
        %594 = vmatmul.mubr.bf16.gmra.mrb[0].mxu0 %v468
        %v595 = vpop.f32.mrb[0].mxu0
        %v596 = vadd.f32 %v495, %v595
        %v597 = vpop.f32.mrb[0].mxu0
        %v598 = vpop.f32.mrb[0].mxu0
        %v599 = vadd.f32 %v495, %v598
        %v600 = vpop.f32.mrb[0].mxu0
        %601 = vmatprep.mubr.bf16.mxu0 0
        %602 = vmatmul.mubr.bf16.gmra.mrb[0].mxu0 %v469
        %v603 = vpop.f32.mrb[0].mxu0
        %v604 = vadd.f32 %v495, %v603
        %v605 = vpop.f32.mrb[0].mxu0
        %v606 = vpop.f32.mrb[0].mxu0
        %v607 = vadd.f32 %v495, %v606
        %v608 = vpop.f32.mrb[0].mxu0
        %609 = vmatprep.mubr.bf16.mxu0 0
        %610 = vmatmul.mubr.bf16.gmra.mrb[0].mxu0 %v470
        %v611 = vpop.f32.mrb[0].mxu0
        %v612 = vadd.f32 %v495, %v611
        %v613 = vpop.f32.mrb[0].mxu0
        %v614 = vpop.f32.mrb[0].mxu0
        %v615 = vadd.f32 %v495, %v614
        %v616 = vpop.f32.mrb[0].mxu0
        %617 = vmatprep.mubr.bf16.mxu0 0
        %618 = vmatmul.mubr.bf16.gmra.mrb[0].mxu0 %v471
        %v619 = vpop.f32.mrb[0].mxu0
        %v620 = vadd.f32 %v495, %v619
        %v621 = vpop.f32.mrb[0].mxu0
        %v622 = vpop.f32.mrb[0].mxu0
        %v623 = vadd.f32 %v495, %v622
        %v624 = vpop.f32.mrb[0].mxu0
        %625 = vmatprep.mubr.bf16.mxu0 0
        %626 = vmatmul.mubr.bf16.gmra.mrb[0].mxu0 %v472
        %v627 = vpop.f32.mrb[0].mxu0
        %v628 = vadd.f32 %v495, %v627
        %v629 = vpop.f32.mrb[0].mxu0
        %v630 = vpop.f32.mrb[0].mxu0
        %v631 = vadd.f32 %v495, %v630
        %v632 = vpop.f32.mrb[0].mxu0
        %633 = vmatprep.mubr.bf16.mxu0 0
        %634 = vmatmul.mubr.bf16.gmra.mrb[0].mxu0 %v473
        %v635 = vpop.f32.mrb[0].mxu0
        %v636 = vadd.f32 %v495, %v635
        %v637 = vpop.f32.mrb[0].mxu0
        %v638 = vpop.f32.mrb[0].mxu0
        %v639 = vadd.f32 %v495, %v638
        %v640 = vpop.f32.mrb[0].mxu0
        %641 = vdwg.mxu0
        %v642 = vmax.f32 %v580, 0.0
        %v643 = vmax.f32 %v583, 0.0
        %v644 = vmax.f32 %v588, 0.0
        %v645 = vmax.f32 %v591, 0.0
        %v646 = vmax.f32 %v596, 0.0
        %v647 = vmax.f32 %v599, 0.0
        %v648 = vmax.f32 %v604, 0.0
        %v649 = vmax.f32 %v607, 0.0
        %v650 = vmax.f32 %v612, 0.0
        %v651 = vmax.f32 %v615, 0.0
        %v652 = vmax.f32 %v620, 0.0
        %v653 = vmax.f32 %v623, 0.0
        %v654 = vmax.f32 %v628, 0.0
        %v655 = vmax.f32 %v631, 0.0
        %v656 = vmax.f32 %v636, 0.0
        %v657 = vmax.f32 %v639, 0.0
        %v658 = vld [vmem:[%s5] sm:$0xf]
        %v659 = vpack.c.bf16 %v643, %v642
        %v660 = vpack.c.bf16 %v645, %v644
        %v661 = vpack.c.bf16 %v647, %v646
        %v662 = vpack.c.bf16 %v649, %v648
        %v663 = vpack.c.bf16 %v651, %v650
        %v664 = vpack.c.bf16 %v653, %v652
        %v665 = vpack.c.bf16 %v655, %v654
        %v666 = vpack.c.bf16 %v657, %v656
        %vm667 = vcmask 523264
        %v669 = vsel %vm667, %v658, 0
        %v672 = vsel %vm667, %v659, 0
        %v675 = vsel %vm667, %v660, 0
        %v678 = vsel %vm667, %v661, 0
        %v681 = vsel %vm667, %v662, 0
        %v684 = vsel %vm667, %v663, 0
        %v687 = vsel %vm667, %v664, 0
        %v690 = vsel %vm667, %v665, 0
        %v693 = vsel %vm667, %v666, 0
        %695 = vmatprep.subr.bf16.mxu0 0
        %696 = vmatpush1.bf16.xpose.msra.mxu0 %v672
        %697 = vmatprep.subr.bf16.mxu0 0
        %698 = vmatpush1.bf16.xpose.msra.mxu0 %v675
        %699 = vmatprep.subr.bf16.mxu0 0
        %700 = vmatpush1.bf16.xpose.msra.mxu0 %v678
        %701 = vmatprep.subr.bf16.mxu0 0
        %702 = vmatpush1.bf16.xpose.msra.mxu0 %v681
        %703 = vmatprep.subr.bf16.mxu0 0
        %704 = vmatpush1.bf16.xpose.msra.mxu0 %v684
        %705 = vmatprep.subr.bf16.mxu0 0
        %706 = vmatpush1.bf16.xpose.msra.mxu0 %v687
        %707 = vmatprep.subr.bf16.mxu0 0
        %708 = vmatpush1.bf16.xpose.msra.mxu0 %v690
        %709 = vmatprep.subr.bf16.mxu0 0
        %710 = vmatpush1.bf16.xpose.msra.mxu0 %v693
        %711 = vmatprep.subr.bf16.mxu0 0
        %712 = vmatpush1.bf16.xpose.msra.mxu0 0
        %713 = vmatprep.subr.bf16.mxu0 0
        %714 = vmatpush1.bf16.xpose.msra.mxu0 0
        %715 = vmatprep.subr.bf16.mxu0 0
        %716 = vmatpush1.bf16.xpose.msra.mxu0 0
        %717 = vmatprep.subr.bf16.mxu0 0
        %718 = vmatpush1.bf16.xpose.msra.mxu0 0
        %719 = vmatprep.subr.bf16.mxu0 0
        %720 = vmatpush1.bf16.xpose.msra.mxu0 0
        %721 = vmatprep.subr.bf16.mxu0 0
        %722 = vmatpush1.bf16.xpose.msra.mxu0 0
        %723 = vmatprep.subr.bf16.mxu0 0
        %724 = vmatpush1.bf16.xpose.msra.mxu0 0
        %725 = vmatprep.subr.bf16.mxu0 0
        %726 = vmatpush1.bf16.xpose.msra.mxu0 0
        %727 = vmatprep.mubr.bf16.mxu0 0
        %728 = vmatmul.mubr.bf16.gmra.mrb[0].mxu0 %v669
        %v729 = vpop.f32.mrb[0].mxu0
        %v730 = vadd.f32 0.0, %v729
        %v731 = vpop.f32.mrb[0].mxu0
        %v732 = vpop.f32.mrb[0].mxu0
        %v733 = vpop.f32.mrb[0].mxu0
        %734 = vdwg.mxu0
        %v735 = vld [vmem:[#allocation2] sm:$0x1]
        %737 = vset.pattern.permute.xlu0 0
        %738 = vperm.xlu0 %737, %v735
        %v739 = vpop.permute.xlu0 %738
        %v741 = vlaneseq
        %v742 = vshrl.u32 %v741, 7
        %v743 = vsub.s32 0, %v742
        %v744 = vrot.slane %v739, %v743
        %v745 = vadd.f32 %v730, %v744
        %746 = vst [vmem:[%s273] sm:$0x1] %v745
        %s747 = sand.u32 %s183, 1
        %s748 = scalar_lea.sflag [#allocation4], %s747
        %s749 = sand.u32 %s183, 1
        %s750 = scalar_lea.vmem [#allocation3], %s749
        // Predicated region
        $region49: #{tpu_custom_call.1} parent=47 // pred_check
          %p751 = pneg %p193
        $region50: #{tpu_custom_call.1} parent=47 // pred_check_branch
          %753 = sbr.rel (%p751) target = $region52
        $region51: #{tpu_custom_call.1} parent=47 // pred_region
          %s755 = ssub.s32 16, 16
          %756 = vsyncadd %s748, %s755
          %s757 = smul.addr %s23, 16
          %s758 = scalar_lea.hbm %s7, %s757
          %s760 = sshll.u32 %s750, 4
          %s761 = int_to_ptr.vmem [resolvable:$true] %s760
          %763 = dma.vmem_to_hbm [thread:$0]  %s761, 16, %s758, %s748
        $region52: #{tpu_custom_call.1} parent=47 // pred_fallthru
          _
      $region48: #{tpu_custom_call.1} parent=5 // pred_fallthru
        _
      %p764 = scmp.le.s32.totalorder 2, %s18
      // Predicated region
      $region53: #{tpu_custom_call.1} parent=5 // pred_check
        %p765 = pneg %p764
      $region54: #{tpu_custom_call.1} parent=5 // pred_check_branch
        %767 = sbr.rel (%p765) target = $region56
      $region55: #{tpu_custom_call.1} parent=5 // pred_region
        %s768 = ssub.s32 %s18, 2
        // Predicated region
        $region57: #{tpu_custom_call.1} parent=55 // pred_check
          %p769 = pneg %p199
        $region58: #{tpu_custom_call.1} parent=55 // pred_check_branch
          %771 = sbr.rel (%p769) target = $region60
        $region59: #{tpu_custom_call.1} parent=55 // pred_region
          %s772 = sand.u32 %s184, 1
          %s773 = scalar_lea.sflag [#allocation4], %s772
          %s774 = sand.u32 %s184, 1
          %s775 = scalar_lea.vmem [#allocation3], %s774
          %776 = dma.done %s773, 16
        $region60: #{tpu_custom_call.1} parent=55 // pred_fallthru
          _
      $region56: #{tpu_custom_call.1} parent=5 // pred_fallthru
        _
    $region6: #{tpu_custom_call.1} parent=1 // loop_footer
      %s22 = sadd.s32 1, %s18
    $region7: #{tpu_custom_call.1} parent=1 // loop_footer_branch
      %17 = sbr.rel target = $region3
    $region8: #{tpu_custom_call.1} parent=1 // loop_exit
      _
    %777 = vsyncpa [#allocation4], 1
    %s778 = scalar_lea.sflag [#allocation4], 1
    %779 = vsyncpa %s778, 1

</llo_original>
